<compile_context>
chip_gen: v5e
topology: v5e:2x2
jax: 0.10.0
libtpu: 0.0.40
codegen_flags: <defaults>
</compile_context>

<pallas_src>
import functools

import jax
import jax.numpy as jnp
from jax.experimental import pallas as pl
from jax.experimental.pallas import tpu as pltpu


def _round_up(x, m):
    return ((x + m - 1) // m) * m


def _vmem_capacity_bytes():
    try:
        info = pltpu.get_tpu_info()
        cap = getattr(info, "vmem_capacity_bytes", None)
        if cap:
            return int(cap)
    except Exception:
        pass
    return 64 * 1024 * 1024  # conservative fallback (v7x per-TC VMEM)


_VMEM_CAP = _vmem_capacity_bytes()


# ----------------------------------------------------------------------------
# Kernels
# ----------------------------------------------------------------------------
def _ffn_kernel_resident(x_ref, w1_ref, b1_ref, w2_ref, b2_ref, o_ref):
    # Weights fully VMEM-resident (constant block index -> DMA'd once).
    # x_ref: (tm, dm_p) bf16; w1: (dm_p, dff_p); w2: (dff_p, dm_p); b* f32.
    h = jnp.dot(x_ref[...], w1_ref[...], preferred_element_type=jnp.float32)
    h = jnp.maximum(h + b1_ref[...], 0.0)                       # bias + ReLU
    y = jnp.dot(h.astype(w2_ref.dtype), w2_ref[...],
                preferred_element_type=jnp.float32)
    o_ref[...] = (y + b2_ref[...]).astype(o_ref.dtype)


def _ffn_kernel_streamed(x_ref, w1_ref, b1_ref, w2_ref, b2_ref, o_ref,
                         acc_ref):
    # d_ff streamed in slices of tkf; f32 accumulator resident over k.
    k = pl.program_id(1)

    @pl.when(k == 0)
    def _():
        acc_ref[...] = jnp.zeros_like(acc_ref)

    h = jnp.dot(x_ref[...], w1_ref[...], preferred_element_type=jnp.float32)
    h = jnp.maximum(h + b1_ref[...], 0.0)                       # bias + ReLU
    acc_ref[...] += jnp.dot(h.astype(w2_ref.dtype), w2_ref[...],
                            preferred_element_type=jnp.float32)

    @pl.when(k == pl.num_programs(1) - 1)
    def _():
        o_ref[...] = (acc_ref[...] + b2_ref[...]).astype(o_ref.dtype)


# ----------------------------------------------------------------------------
# Wrapper
# ----------------------------------------------------------------------------
@functools.partial(jax.jit, static_argnames=("tm", "tkf_max", "compute_dtype"))
def position_wise_feed_forward(x, w1, b1, w2, b2, *, tm=512, tkf_max=2048,
                               compute_dtype=jnp.bfloat16):
    """x: (batch, seq, d_model). w1: (d_model, d_ff), w2: (d_ff, d_model)."""
    batch, seq, d_model = x.shape
    d_ff = w1.shape[1]
    out_dtype = x.dtype
    M = batch * seq

    itm = jnp.dtype(compute_dtype).itemsize
    ito = jnp.dtype(out_dtype).itemsize

    dm_p = _round_up(d_model, 128)          # lane-dense feature dims
    dff_p = _round_up(d_ff, 128)

    cap = _VMEM_CAP
    weight_budget = cap // 3                # ~42 MiB v5e/v6e, ~21 MiB v7x
    total_budget = int(cap * 0.8)

    # --- d_ff (reduction) tiling -------------------------------------------
    # Resident path: double-buffered bf16 W1+W2 fit the weight budget.
    resident_weight_bytes = 2 * 2 * dm_p * dff_p * itm
    if resident_weight_bytes <= weight_budget:
        tkf = dff_p                          # single k step, weights resident
    else:
        # Largest 128-multiple divisor of dff_p that is <= tkf_max and whose
        # double-buffered W1+W2 slices fit the weight budget (v7x-safe).
        slice_cap = max(128, (weight_budget // (4 * dm_p * itm)) // 128 * 128)
        tkf_cap = min(tkf_max, dff_p, slice_cap)
        blocks = dff_p // 128
        tkf = 128
        for nb in range(tkf_cap // 128, 0, -1):
            if blocks % nb == 0:
                tkf = nb * 128
                break
    n_k = dff_p // tkf

    # --- row (M) tiling ------------------------------------------------------
    m_16 = _round_up(M, 16)                  # bf16 sublane packing
    tm_eff = min(tm, m_16)

    def _vmem_need(tme):
        need = 2 * tme * dm_p * itm          # x tile (double-buffered)
        need += 2 * tme * dm_p * ito         # out tile
        need += 2 * 2 * dm_p * tkf * itm     # W1 + W2 slices (double-buffered)
        need += 2 * (tkf + dm_p) * 4         # biases
        need += tme * tkf * 4                # f32 hidden intermediate
        if n_k > 1:
            need += tme * dm_p * 4           # f32 accumulator scratch
        return need

    while _vmem_need(tm_eff) > total_budget and tm_eff > 64:
        tm_eff = max(64, _round_up(tm_eff // 2, 16))

    # v7x megacore: when M is big enough, never leave a single M tile
    # (one TensorCore would sit idle); split so the "parallel" axis shards.
    if m_16 // tm_eff < 2 and m_16 >= 256:
        tm_eff = _round_up((m_16 + 1) // 2, 16)

    m_p = _round_up(M, tm_eff)
    n_m = m_p // tm_eff

    # --- pad / cast (skipped entirely when shapes & dtypes already match) ---
    x2d = x.reshape(M, d_model).astype(compute_dtype)
    if (M, d_model) != (m_p, dm_p):
        x2d = jnp.pad(x2d, ((0, m_p - M), (0, dm_p - d_model)))

    w1_p = w1.astype(compute_dtype)
    if (d_model, d_ff) != (dm_p, dff_p):
        w1_p = jnp.pad(w1_p, ((0, dm_p - d_model), (0, dff_p - d_ff)))

    w2_p = w2.astype(compute_dtype)
    if (d_ff, d_model) != (dff_p, dm_p):
        w2_p = jnp.pad(w2_p, ((0, dff_p - d_ff), (0, dm_p - d_model)))

    b1_p = b1.astype(jnp.float32)
    if d_ff != dff_p:
        b1_p = jnp.pad(b1_p, (0, dff_p - d_ff))
    b1_p = b1_p.reshape(1, dff_p)

    b2_p = b2.astype(jnp.float32)
    if d_model != dm_p:
        b2_p = jnp.pad(b2_p, (0, dm_p - d_model))
    b2_p = b2_p.reshape(1, dm_p)

    # --- cost estimate (consistent with chosen path) -------------------------
    weight_reads = (1 if n_k == 1 else n_m)  # resident: weights read once
    cost = pl.CostEstimate(
        flops=4 * m_p * dm_p * dff_p,
        transcendentals=0,
        bytes_accessed=(m_p * dm_p * itm
                        + weight_reads * 2 * dm_p * dff_p * itm
                        + (dff_p + dm_p) * 4
                        + m_p * dm_p * ito),
    )
    vmem_limit = int(min(cap * 0.85,
                         max(_vmem_need(tm_eff) + (8 << 20), 32 << 20)))

    # --- pallas_call ---------------------------------------------------------
    if n_k == 1:
        grid = (n_m,)
        in_specs = [
            pl.BlockSpec((tm_eff, dm_p), lambda i: (i, 0)),   # x tile
            pl.BlockSpec((dm_p, tkf),    lambda i: (0, 0)),   # W1 (resident)
            pl.BlockSpec((1, tkf),       lambda i: (0, 0)),   # b1
            pl.BlockSpec((tkf, dm_p),    lambda i: (0, 0)),   # W2 (resident)
            pl.BlockSpec((1, dm_p),      lambda i: (0, 0)),   # b2
        ]
        out_specs = pl.BlockSpec((tm_eff, dm_p), lambda i: (i, 0))
        kernel = _ffn_kernel_resident
        scratch_shapes = []
        dim_sem = ("parallel",)
    else:
        grid = (n_m, n_k)
        in_specs = [
            pl.BlockSpec((tm_eff, dm_p), lambda i, k: (i, 0)),  # x tile
            pl.BlockSpec((dm_p, tkf),    lambda i, k: (0, k)),  # W1 slice
            pl.BlockSpec((1, tkf),       lambda i, k: (0, k)),  # b1 slice
            pl.BlockSpec((tkf, dm_p),    lambda i, k: (k, 0)),  # W2 slice
            pl.BlockSpec((1, dm_p),      lambda i, k: (0, 0)),  # b2
        ]
        out_specs = pl.BlockSpec((tm_eff, dm_p), lambda i, k: (i, 0))
        kernel = _ffn_kernel_streamed
        scratch_shapes = [pltpu.VMEM((tm_eff, dm_p), jnp.float32)]
        dim_sem = ("parallel", "arbitrary")

    out = pl.pallas_call(
        kernel,
        out_shape=jax.ShapeDtypeStruct((m_p, dm_p), out_dtype),
        grid_spec=pltpu.PrefetchScalarGridSpec(
            num_scalar_prefetch=0,
            grid=grid,
            in_specs=in_specs,
            out_specs=out_specs,
            scratch_shapes=scratch_shapes),
        compiler_params=pltpu.CompilerParams(
            dimension_semantics=dim_sem,
            vmem_limit_bytes=vmem_limit),
        cost_estimate=cost,
    )(x2d, w1_p, b1_p, w2_p, b2_p)

    if (m_p, dm_p) != (M, d_model):
        out = out[:M, :d_model]
    return out.reshape(batch, seq, d_model)


# ----------------------------------------------------------------------------
# Parameter init (nn.Linear-style) and self-test
# ----------------------------------------------------------------------------
def init_params(key, d_model, d_ff, dtype=jnp.float32):
    """Uniform +/- 1/sqrt(fan_in), like nn.Linear.  W1: (d_model, d_ff),
    W2: (d_ff, d_model) — pre-transposed so the kernel computes x @ W."""
    k1, k2, k3, k4 = jax.random.split(key, 4)
    bound1 = 1.0 / jnp.sqrt(d_model)
    bound2 = 1.0 / jnp.sqrt(d_ff)
    w1 = jax.random.uniform(k1, (d_model, d_ff), dtype, -bound1, bound1)
    b1 = jax.random.uniform(k2, (d_ff,), dtype, -bound1, bound1)
    w2 = jax.random.uniform(k3, (d_ff, d_model), dtype, -bound2, bound2)
    b2 = jax.random.uniform(k4, (d_model,), dtype, -bound2, bound2)
    return w1, b1, w2, b2


if __name__ == "__main__":
    key = jax.random.PRNGKey(0)
    kx, kp = jax.random.split(key)

    batch, seq, d_model, d_ff = 2, 8, 32, 64
    x = jax.random.normal(kx, (batch, seq, d_model), jnp.float32)
    w1, b1, w2, b2 = init_params(kp, d_model, d_ff)

    y = position_wise_feed_forward(x, w1, b1, w2, b2)
    y = jax.block_until_ready(y)

    # Reference in plain JAX (eval-mode dropout == identity).
    # Kernel uses bf16 operands with f32 accumulation -> relaxed tolerance.
    ref = jnp.maximum(x @ w1 + b1, 0.0) @ w2 + b2
    assert y.shape == (batch, seq, d_model)
    assert jnp.allclose(y, ref, atol=5e-2, rtol=5e-2), float(
        jnp.max(jnp.abs(y - ref)))

    print("KERNEL_OK")
</pallas_src>

<mosaic_0001>
module attributes {stable_mosaic.version = 11 : i64} {
  func.func @_ffn_kernel_resident(%arg0: i32, %arg1: memref<16x128xbf16, #tpu.memory_space<vmem>>, %arg2: memref<128x128xbf16, #tpu.memory_space<vmem>>, %arg3: memref<1x128xf32, #tpu.memory_space<vmem>>, %arg4: memref<128x128xbf16, #tpu.memory_space<vmem>>, %arg5: memref<1x128xf32, #tpu.memory_space<vmem>>, %arg6: memref<16x128xf32, #tpu.memory_space<vmem>>) attributes {dimension_semantics = [#tpu.dimension_semantics<parallel>], iteration_bounds = array<i64: 1>, scalar_prefetch = 0 : i64, scratch_operands = 0 : i64, tpu.core_type = #tpu.core_type<tc>, window_params = [{transform_indices = @transform_0, window_bounds = array<i64: 16, 128>}, {pipeline_mode = #tpu.pipeline_mode<synchronous>, transform_indices = @transform_1, window_bounds = array<i64: 128, 128>}, {pipeline_mode = #tpu.pipeline_mode<synchronous>, transform_indices = @transform_2, window_bounds = array<i64: 1, 128>}, {pipeline_mode = #tpu.pipeline_mode<synchronous>, transform_indices = @transform_3, window_bounds = array<i64: 128, 128>}, {pipeline_mode = #tpu.pipeline_mode<synchronous>, transform_indices = @transform_4, window_bounds = array<i64: 1, 128>}, {transform_indices = @transform_5, window_bounds = array<i64: 16, 128>}]} {
    %c0 = arith.constant 0 : index
    %c0_0 = arith.constant 0 : index
    %0 = vector.load %arg1[%c0, %c0_0] : memref<16x128xbf16, #tpu.memory_space<vmem>>, vector<16x128xbf16>
    %c0_1 = arith.constant 0 : index
    %c0_2 = arith.constant 0 : index
    %1 = vector.load %arg2[%c0_1, %c0_2] : memref<128x128xbf16, #tpu.memory_space<vmem>>, vector<128x128xbf16>
    %cst = arith.constant dense<0.000000e+00> : vector<16x128xf32>
    %2 = tpu.matmul %0, %1, %cst {dimension_numbers = #tpu.dot_dimension_numbers<[1], [0], [0], [1], [0, 0, 1, 1], [], []>} : vector<16x128xbf16>, vector<128x128xbf16>, vector<16x128xf32> -> vector<16x128xf32>
    %c0_3 = arith.constant 0 : index
    %c0_4 = arith.constant 0 : index
    %3 = vector.load %arg3[%c0_3, %c0_4] : memref<1x128xf32, #tpu.memory_space<vmem>>, vector<1x128xf32>
    %4 = vector.broadcast %3 : vector<1x128xf32> to vector<16x128xf32>
    %5 = arith.addf %2, %4 : vector<16x128xf32>
    %cst_5 = arith.constant 0.000000e+00 : f32
    %6 = vector.broadcast %cst_5 : f32 to vector<16x128xf32>
    %7 = arith.maximumf %5, %6 : vector<16x128xf32>
    %8 = arith.truncf %7 : vector<16x128xf32> to vector<16x128xbf16>
    %c0_6 = arith.constant 0 : index
    %c0_7 = arith.constant 0 : index
    %9 = vector.load %arg4[%c0_6, %c0_7] : memref<128x128xbf16, #tpu.memory_space<vmem>>, vector<128x128xbf16>
    %cst_8 = arith.constant dense<0.000000e+00> : vector<16x128xf32>
    %10 = tpu.matmul %8, %9, %cst_8 {dimension_numbers = #tpu.dot_dimension_numbers<[1], [0], [0], [1], [0, 0, 1, 1], [], []>} : vector<16x128xbf16>, vector<128x128xbf16>, vector<16x128xf32> -> vector<16x128xf32>
    %c0_9 = arith.constant 0 : index
    %c0_10 = arith.constant 0 : index
    %11 = vector.load %arg5[%c0_9, %c0_10] : memref<1x128xf32, #tpu.memory_space<vmem>>, vector<1x128xf32>
    %12 = vector.broadcast %11 : vector<1x128xf32> to vector<16x128xf32>
    %13 = arith.addf %10, %12 : vector<16x128xf32>
    %c0_11 = arith.constant 0 : index
    %c0_12 = arith.constant 0 : index
    %14 = vector.load %arg6[%c0_11, %c0_12] : memref<16x128xf32, #tpu.memory_space<vmem>>, vector<16x128xf32>
    tpu.vector_store %arg6[%c0_11, %c0_12], %13 {strides = array<i32>} : memref<16x128xf32, #tpu.memory_space<vmem>>, vector<16x128xf32>,
    return
  }
  func.func @transform_0(%arg0: i32) -> (i32, i32) {
    %c0_i32 = arith.constant 0 : i32
    %c0_i32_0 = arith.constant 0 : i32
    return %arg0, %c0_i32 : i32, i32
  }
  func.func @transform_1(%arg0: i32) -> (i32, i32) {
    %c0_i32 = arith.constant 0 : i32
    %c0_i32_0 = arith.constant 0 : i32
    %c0_i32_1 = arith.constant 0 : i32
    return %c0_i32, %c0_i32_0 : i32, i32
  }
  func.func @transform_2(%arg0: i32) -> (i32, i32) {
    %c0_i32 = arith.constant 0 : i32
    %c0_i32_0 = arith.constant 0 : i32
    %c0_i32_1 = arith.constant 0 : i32
    return %c0_i32, %c0_i32_0 : i32, i32
  }
  func.func @transform_3(%arg0: i32) -> (i32, i32) {
    %c0_i32 = arith.constant 0 : i32
    %c0_i32_0 = arith.constant 0 : i32
    %c0_i32_1 = arith.constant 0 : i32
    return %c0_i32, %c0_i32_0 : i32, i32
  }
  func.func @transform_4(%arg0: i32) -> (i32, i32) {
    %c0_i32 = arith.constant 0 : i32
    %c0_i32_0 = arith.constant 0 : i32
    %c0_i32_1 = arith.constant 0 : i32
    return %c0_i32, %c0_i32_0 : i32, i32
  }
  func.func @transform_5(%arg0: i32) -> (i32, i32) {
    %c0_i32 = arith.constant 0 : i32
    %c0_i32_0 = arith.constant 0 : i32
    return %arg0, %c0_i32 : i32, i32
  }
}

</mosaic_0001>

<llo_original>
// kernel: position_wise_feed_forward.1
$region0: #{position_wise_feed_forward.1}
  #allocation0 [shape = 'u32[]', space=smem, size = 0x4, offset = 0x4, fixed_abs, tag = 'smem constant byte address 0x4 - core index']
  #allocation1 [shape = 'u32[72,128]{1,0:T(1,128)}', space=vmem, size = 0x9000, scoped, tag = 'internal scratch']
  %s0 = inlined_call_operand.vmem [shape: bf16[16,128], index: 0, kind: input, shape index: {}]
  %s1 = inlined_call_operand.vmem [shape: bf16[128,128], index: 1, kind: input, shape index: {}]
  %s2 = inlined_call_operand.vmem [shape: f32[1,128], index: 2, kind: input, shape index: {}]
  %s3 = inlined_call_operand.vmem [shape: bf16[128,128], index: 3, kind: input, shape index: {}]
  %s4 = inlined_call_operand.vmem [shape: f32[1,128], index: 4, kind: input, shape index: {}]
  %s5 = inlined_call_operand.vmem [shape: f32[16,128], index: 5, kind: output, shape index: {}]
  %s6 = sld [smem:[#allocation0]]
  $region30: #{position_wise_feed_forward.1} parent=0
    _
  %s8 = ssub.s32 1, %s6
  %s9 = scalar_select 0, %s8, %s6
  // Predicated region
  $region2: #{position_wise_feed_forward.1} parent=0 // pred_check
    _
  $region3: #{position_wise_feed_forward.1} parent=0 // pred_check_branch
    %11 = sbr.rel (0) target = $region5
  $region4: #{position_wise_feed_forward.1} parent=0 // pred_region
    _
  $region5: #{position_wise_feed_forward.1} parent=0 // pred_fallthru
    _
  // Predicated region
  $region6: #{position_wise_feed_forward.1} parent=0 // pred_check
    _
  $region7: #{position_wise_feed_forward.1} parent=0 // pred_check_branch
    %13 = sbr.rel (0) target = $region9
  $region8: #{position_wise_feed_forward.1} parent=0 // pred_region
    _
  $region9: #{position_wise_feed_forward.1} parent=0 // pred_fallthru
    _
  // Predicated region
  $region10: #{position_wise_feed_forward.1} parent=0 // pred_check
    _
  $region11: #{position_wise_feed_forward.1} parent=0 // pred_check_branch
    %15 = sbr.rel (0) target = $region13
  $region12: #{position_wise_feed_forward.1} parent=0 // pred_region
    _
  $region13: #{position_wise_feed_forward.1} parent=0 // pred_fallthru
    _
  // Predicated region
  $region14: #{position_wise_feed_forward.1} parent=0 // pred_check
    _
  $region15: #{position_wise_feed_forward.1} parent=0 // pred_check_branch
    %17 = sbr.rel (0) target = $region17
  $region16: #{position_wise_feed_forward.1} parent=0 // pred_region
    _
  $region17: #{position_wise_feed_forward.1} parent=0 // pred_fallthru
    _
  // Predicated region
  $region18: #{position_wise_feed_forward.1} parent=0 // pred_check
    _
  $region19: #{position_wise_feed_forward.1} parent=0 // pred_check_branch
    %19 = sbr.rel (0) target = $region21
  $region20: #{position_wise_feed_forward.1} parent=0 // pred_region
    _
  $region21: #{position_wise_feed_forward.1} parent=0 // pred_fallthru
    _
  %v20 = vld [vmem:[%s0] sm:$0xf]
  %v21 = vld [vmem:[%s0 + $0x4] sm:$0xf]
  %v22 = vld [vmem:[%s1] sm:$0xf]
  %v23 = vld [vmem:[%s1 + $0x4] sm:$0xf]
  %v24 = vld [vmem:[%s1 + $0x8] sm:$0xf]
  %v25 = vld [vmem:[%s1 + $0xc] sm:$0xf]
  %v26 = vld [vmem:[%s1 + $0x10] sm:$0xf]
  %v27 = vld [vmem:[%s1 + $0x14] sm:$0xf]
  %v28 = vld [vmem:[%s1 + $0x18] sm:$0xf]
  %v29 = vld [vmem:[%s1 + $0x1c] sm:$0xf]
  %v30 = vld [vmem:[%s1 + $0x20] sm:$0xf]
  %v31 = vld [vmem:[%s1 + $0x24] sm:$0xf]
  %v32 = vld [vmem:[%s1 + $0x28] sm:$0xf]
  %v33 = vld [vmem:[%s1 + $0x2c] sm:$0xf]
  %v34 = vld [vmem:[%s1 + $0x30] sm:$0xf]
  %v35 = vld [vmem:[%s1 + $0x34] sm:$0xf]
  %v36 = vld [vmem:[%s1 + $0x38] sm:$0xf]
  %v37 = vld [vmem:[%s1 + $0x3c] sm:$0xf]
  %v38 = vld [vmem:[%s2] sm:$0x1]
  %v40 = vperm.slane %v38, 0
  %v44 = vunpack.c.l.b16 %v20
  %v45 = vunpack.c.l.b16 %v21
  %v46 = vpack.c.b16 %v45, %v44
  %v64 = vunpack.c.l.b16 %v22
  %v65 = vunpack.c.l.b16 %v23
  %v66 = vunpack.c.l.b16 %v24
  %v67 = vunpack.c.l.b16 %v25
  %v68 = vunpack.c.l.b16 %v26
  %v69 = vunpack.c.l.b16 %v27
  %v70 = vunpack.c.l.b16 %v28
  %v71 = vunpack.c.l.b16 %v29
  %v72 = vunpack.c.l.b16 %v30
  %v73 = vunpack.c.l.b16 %v31
  %v74 = vunpack.c.l.b16 %v32
  %v75 = vunpack.c.l.b16 %v33
  %v76 = vunpack.c.l.b16 %v34
  %v77 = vunpack.c.l.b16 %v35
  %v78 = vunpack.c.l.b16 %v36
  %v79 = vunpack.c.l.b16 %v37
  %v80 = vpack.c.b16 %v65, %v64
  %v81 = vpack.c.b16 %v67, %v66
  %v82 = vpack.c.b16 %v69, %v68
  %v83 = vpack.c.b16 %v71, %v70
  %v84 = vpack.c.b16 %v73, %v72
  %v85 = vpack.c.b16 %v75, %v74
  %v86 = vpack.c.b16 %v77, %v76
  %v87 = vpack.c.b16 %v79, %v78
  %96 = vmatpush.bf16.msra.mxu0 %v87
  %97 = vmatpush.bf16.msra.mxu0 %v86
  %98 = vmatpush.bf16.msra.mxu0 %v85
  %99 = vmatpush.bf16.msra.mxu0 %v84
  %100 = vmatpush.bf16.msra.mxu0 %v83
  %101 = vmatpush.bf16.msra.mxu0 %v82
  %102 = vmatpush.bf16.msra.mxu0 %v81
  %103 = vmatpush.bf16.msra.mxu0 %v80
  %104 = vmatmul.bf16.gmra.mxu0 %v46
  %v105 = vpop.f32.mrf.mxu0
  %v106 = vadd.f32 %v40, %v105
  %v107 = vpop.f32.mrf.mxu0
  %v108 = vadd.f32 %v40, %v107
  %109 = vdwg.mxu0
  %v110 = vmax.f32 %v106, 0.0
  %v111 = vmax.f32 %v108, 0.0
  %v112 = vpack.c.bf16 %v111, %v110
  %v113 = vld [vmem:[%s3] sm:$0xf]
  %v114 = vld [vmem:[%s3 + $0x4] sm:$0xf]
  %v115 = vld [vmem:[%s3 + $0x8] sm:$0xf]
  %v116 = vld [vmem:[%s3 + $0xc] sm:$0xf]
  %v117 = vld [vmem:[%s3 + $0x10] sm:$0xf]
  %v118 = vld [vmem:[%s3 + $0x14] sm:$0xf]
  %v119 = vld [vmem:[%s3 + $0x18] sm:$0xf]
  %v120 = vld [vmem:[%s3 + $0x1c] sm:$0xf]
  %v121 = vld [vmem:[%s3 + $0x20] sm:$0xf]
  %v122 = vld [vmem:[%s3 + $0x24] sm:$0xf]
  %v123 = vld [vmem:[%s3 + $0x28] sm:$0xf]
  %v124 = vld [vmem:[%s3 + $0x2c] sm:$0xf]
  %v125 = vld [vmem:[%s3 + $0x30] sm:$0xf]
  %v126 = vld [vmem:[%s3 + $0x34] sm:$0xf]
  %v127 = vld [vmem:[%s3 + $0x38] sm:$0xf]
  %v128 = vld [vmem:[%s3 + $0x3c] sm:$0xf]
  %v129 = vld [vmem:[%s4] sm:$0x1]
  %v131 = vperm.slane %v129, 0
  %v149 = vunpack.c.l.b16 %v113
  %v150 = vunpack.c.l.b16 %v114
  %v151 = vunpack.c.l.b16 %v115
  %v152 = vunpack.c.l.b16 %v116
  %v153 = vunpack.c.l.b16 %v117
  %v154 = vunpack.c.l.b16 %v118
  %v155 = vunpack.c.l.b16 %v119
  %v156 = vunpack.c.l.b16 %v120
  %v157 = vunpack.c.l.b16 %v121
  %v158 = vunpack.c.l.b16 %v122
  %v159 = vunpack.c.l.b16 %v123
  %v160 = vunpack.c.l.b16 %v124
  %v161 = vunpack.c.l.b16 %v125
  %v162 = vunpack.c.l.b16 %v126
  %v163 = vunpack.c.l.b16 %v127
  %v164 = vunpack.c.l.b16 %v128
  %v165 = vpack.c.b16 %v150, %v149
  %v166 = vpack.c.b16 %v152, %v151
  %v167 = vpack.c.b16 %v154, %v153
  %v168 = vpack.c.b16 %v156, %v155
  %v169 = vpack.c.b16 %v158, %v157
  %v170 = vpack.c.b16 %v160, %v159
  %v171 = vpack.c.b16 %v162, %v161
  %v172 = vpack.c.b16 %v164, %v163
  %181 = vmatpush.bf16.msra.mxu0 %v172
  %182 = vmatpush.bf16.msra.mxu0 %v171
  %183 = vmatpush.bf16.msra.mxu0 %v170
  %184 = vmatpush.bf16.msra.mxu0 %v169
  %185 = vmatpush.bf16.msra.mxu0 %v168
  %186 = vmatpush.bf16.msra.mxu0 %v167
  %187 = vmatpush.bf16.msra.mxu0 %v166
  %188 = vmatpush.bf16.msra.mxu0 %v165
  %189 = vmatmul.bf16.gmra.mxu0 %v112
  %v190 = vpop.f32.mrf.mxu0
  %v191 = vadd.f32 %v131, %v190
  %v192 = vpop.f32.mrf.mxu0
  %v193 = vadd.f32 %v131, %v192
  %194 = vdwg.mxu0
  %195 = vst [vmem:[%s5] sm:$0xff] %v191
  %196 = vst [vmem:[%s5 + $0x8] sm:$0xff] %v193
  // Predicated region
  $region22: #{position_wise_feed_forward.1} parent=0 // pred_check
    _
  $region23: #{position_wise_feed_forward.1} parent=0 // pred_check_branch
    %198 = sbr.rel (0) target = $region25
  $region24: #{position_wise_feed_forward.1} parent=0 // pred_region
    _
  $region25: #{position_wise_feed_forward.1} parent=0 // pred_fallthru
    _
  // Predicated region
  $region26: #{position_wise_feed_forward.1} parent=0 // pred_check
    _
  $region27: #{position_wise_feed_forward.1} parent=0 // pred_check_branch
    %200 = sbr.rel (0) target = $region29
  $region28: #{position_wise_feed_forward.1} parent=0 // pred_region
    _
  $region29: #{position_wise_feed_forward.1} parent=0 // pred_fallthru
    _

</llo_original>
